<compile_context>
chip_gen: v7x
topology: tpu7x:2x2x1
jax: 0.10.0
libtpu: 0.0.40
codegen_flags: <defaults>
</compile_context>

<pallas_src>
import functools

import jax
import jax.numpy as jnp
from jax.experimental import pallas as pl
from jax.experimental.pallas import tpu as pltpu


def scale_affine_kernel(x_ref, o_ref, *, k):
    """o = block-average of x over contiguous groups of k lanes (== x @ W^T)."""
    H = x_ref.shape[-1]
    out_dim = o_ref.shape[-1]

    # Build the (H, out_dim) block-selector on the fly:
    #   sel[h, o] = 1 if o*k <= h < (o+1)*k else 0
    # Exact 0/1 values in any dtype, so the bf16 MXU path stays exact; the 1/k
    # scaling is applied afterwards in f32.
    row = jax.lax.broadcasted_iota(jnp.int32, (H, out_dim), 0)
    col = jax.lax.broadcasted_iota(jnp.int32, (H, out_dim), 1)
    sel = ((row >= col * k) & (row < (col + 1) * k)).astype(x_ref.dtype)

    group_sums = jnp.dot(x_ref[...], sel, preferred_element_type=jnp.float32)
    o_ref[...] = (group_sums * jnp.float32(1.0 / k)).astype(o_ref.dtype)


def _pick_row_tile(B, H, out_dim, itemsize, vmem_budget=24 * 1024 * 1024):
    """Largest power-of-two row tile whose double-buffered tiles fit the budget."""
    tm = 1024
    while tm > 8 and 2 * tm * (H + out_dim) * itemsize > vmem_budget:
        tm //= 2
    if B <= tm:
        return B  # full-extent batch block (always legal regardless of B % 8)
    return tm     # power of two >= 8 -> satisfies the (8, 128) tiling rule


def scale_layer_affine(x, out_dim):
    """Forward of ScaleLayerAffine: x (B, hidden_sz) -> (B, out_dim)."""
    B, H = x.shape
    if H % out_dim != 0:
        raise RuntimeError("Not mod!")
    k = H // out_dim

    itemsize = jnp.dtype(x.dtype).itemsize
    tm = _pick_row_tile(B, H, out_dim, itemsize)
    grid = (pl.cdiv(B, tm),)

    cost = pl.CostEstimate(
        flops=2 * B * H * out_dim,
        transcendentals=0,
        bytes_accessed=B * H * itemsize + B * out_dim * itemsize,
    )

    return pl.pallas_call(
        functools.partial(scale_affine_kernel, k=k),
        out_shape=jax.ShapeDtypeStruct((B, out_dim), x.dtype),
        grid=grid,
        in_specs=[pl.BlockSpec((tm, H), lambda i: (i, 0))],
        out_specs=pl.BlockSpec((tm, out_dim), lambda i: (i, 0)),
        compiler_params=pltpu.CompilerParams(
            dimension_semantics=("parallel",),
            vmem_limit_bytes=48 * 1024 * 1024,
        ),
        cost_estimate=cost,
    )(x)


def make_scale_params(hidden_sz, out_dim, dtype=jnp.float32):
    """Reference-only: W, b exactly as ScaleLayerAffine.init_scale_weigths()."""
    assert hidden_sz % out_dim == 0, "Not mod!"
    k = hidden_sz // out_dim
    w = jnp.kron(jnp.eye(out_dim, dtype=dtype),
                 jnp.ones((1, k), dtype=dtype) / k)      # (out_dim, hidden_sz)
    b = jnp.zeros((out_dim,), dtype=dtype)
    return w, b


if __name__ == "__main__":
    B = 2
    hidden_sz = 32
    out_dim = 8

    key = jax.random.PRNGKey(0)
    x = jax.random.normal(key, (B, hidden_sz), dtype=jnp.float32)

    y = scale_layer_affine(x, out_dim)
    y = jax.block_until_ready(y)

    # Pure-JAX reference of the same module semantics (x @ W^T + 0).
    w, b = make_scale_params(hidden_sz, out_dim)
    y_ref = x @ w.T + b

    assert y.shape == (B, out_dim)
    assert jnp.allclose(y, y_ref, atol=1e-5, rtol=1e-5)

    print("KERNEL_OK")
</pallas_src>

<mosaic_0001>
module attributes {stable_mosaic.version = 11 : i64} {
  func.func @scale_affine_kernel(%arg0: i32, %arg1: memref<2x32xf32, #tpu.memory_space<vmem>>, %arg2: memref<2x8xf32, #tpu.memory_space<vmem>>) attributes {dimension_semantics = [#tpu.dimension_semantics<parallel>], iteration_bounds = array<i64: 1>, scalar_prefetch = 0 : i64, scratch_operands = 0 : i64, tpu.core_type = #tpu.core_type<tc>, window_params = [{transform_indices = @transform_0, window_bounds = array<i64: 2, 32>}, {transform_indices = @transform_1, window_bounds = array<i64: 2, 8>}]} {
    %0 = tpu.iota {dimensions = array<i32: 0>} : vector<32x8xi32>
    %1 = tpu.iota {dimensions = array<i32: 1>} : vector<32x8xi32>
    %c4_i32 = arith.constant 4 : i32
    %2 = vector.broadcast %c4_i32 : i32 to vector<32x8xi32>
    %3 = arith.muli %1, %2 : vector<32x8xi32>
    %4 = arith.cmpi sge, %0, %3 : vector<32x8xi32>
    %c1_i32 = arith.constant 1 : i32
    %5 = vector.broadcast %c1_i32 : i32 to vector<32x8xi32>
    %6 = arith.addi %1, %5 : vector<32x8xi32>
    %c4_i32_0 = arith.constant 4 : i32
    %7 = vector.broadcast %c4_i32_0 : i32 to vector<32x8xi32>
    %8 = arith.muli %6, %7 : vector<32x8xi32>
    %9 = arith.cmpi slt, %0, %8 : vector<32x8xi32>
    %10 = arith.andi %4, %9 : vector<32x8xi1>
    %11 = arith.extui %10 : vector<32x8xi1> to vector<32x8xi32>
    %12 = arith.sitofp %11 : vector<32x8xi32> to vector<32x8xf32>
    %c0 = arith.constant 0 : index
    %c0_1 = arith.constant 0 : index
    %13 = vector.load %arg1[%c0, %c0_1] : memref<2x32xf32, #tpu.memory_space<vmem>>, vector<2x32xf32>
    %cst = arith.constant dense<0.000000e+00> : vector<2x8xf32>
    %14 = tpu.matmul %13, %12, %cst {dimension_numbers = #tpu.dot_dimension_numbers<[1], [0], [0], [1], [0, 0, 1, 1], [], []>} : vector<2x32xf32>, vector<32x8xf32>, vector<2x8xf32> -> vector<2x8xf32>
    %cst_2 = arith.constant 2.500000e-01 : f32
    %15 = vector.broadcast %cst_2 : f32 to vector<2x8xf32>
    %16 = arith.mulf %14, %15 : vector<2x8xf32>
    %c0_3 = arith.constant 0 : index
    %c0_4 = arith.constant 0 : index
    %17 = vector.load %arg2[%c0_3, %c0_4] : memref<2x8xf32, #tpu.memory_space<vmem>>, vector<2x8xf32>
    tpu.vector_store %arg2[%c0_3, %c0_4], %16 {strides = array<i32>} : memref<2x8xf32, #tpu.memory_space<vmem>>, vector<2x8xf32>,
    return
  }
  func.func @transform_0(%arg0: i32) -> (i32, i32) {
    %c0_i32 = arith.constant 0 : i32
    %c0_i32_0 = arith.constant 0 : i32
    return %arg0, %c0_i32 : i32, i32
  }
  func.func @transform_1(%arg0: i32) -> (i32, i32) {
    %c0_i32 = arith.constant 0 : i32
    %c0_i32_0 = arith.constant 0 : i32
    return %arg0, %c0_i32 : i32, i32
  }
}

</mosaic_0001>

<llo_original>
// kernel: tpu_custom_call.1
$region0: #{tpu_custom_call.1}
  #allocation0 [shape = 'u32[]', space=smem, size = 0x4, offset = 0x4, fixed_abs, tag = 'smem constant byte address 0x4 - core index']
  #allocation1 [shape = 'u32[144,128]{1,0:T(1,128)}', space=vmem, size = 0x12000, scoped, tag = 'internal scratch']
  %s0 = inlined_call_operand.hbm [shape: f32[2,32], index: 0, kind: input, shape index: {}]
  %s1 = inlined_call_operand.hbm [shape: f32[2,8], index: 1, kind: output, shape index: {}]
  %s2 = sld [smem:[#allocation0]]
  $region18: #{tpu_custom_call.1} parent=0
    _
  %s4 = ssub.s32 1, %s2
  %s5 = scalar_select 0, %s4, %s2
  $region1: #{tpu_custom_call.1} parent=0
    #allocation2 [shape = 'u8[1024]{0}', space=vmem, size = 0x400, scoped, tag = 'input window, operand 0, single buffered']
    #allocation3 [shape = 's32[1]{0}', space=sflag, size = 0x4, scoped, tag = 'scoped memory for tpu_custom_call.1']
    #allocation4 [shape = 's32[1]{0}', space=sflag, size = 0x4, scoped, tag = 'scoped memory for tpu_custom_call.1']
    #allocation5 [shape = 'u8[1024]{0}', space=vmem, size = 0x400, scoped, tag = 'output window, operand 0, single buffered']
    %6 = vsyncpa [#allocation3], 0
    %7 = vsyncpa [#allocation4], 0
    // Predicated region
    $region2: #{tpu_custom_call.1} parent=1 // pred_check
      _
    $region3: #{tpu_custom_call.1} parent=1 // pred_check_branch
      %9 = sbr.rel (0) target = $region5
    $region4: #{tpu_custom_call.1} parent=1 // pred_region
      %s11 = ssub.s32 32, 32
      %12 = vsyncadd [#allocation3], %s11
      %s14 = sshll.u32 [#allocation2], 4
      %s15 = int_to_ptr.vmem [resolvable:$true] %s14
      %17 = dma.hbm_to_vmem [thread:$0]  %s0, 32, %s15, [#allocation3]
    $region5: #{tpu_custom_call.1} parent=1 // pred_fallthru
      _
    // Predicated region
    $region6: #{tpu_custom_call.1} parent=1 // pred_check
      _
    $region7: #{tpu_custom_call.1} parent=1 // pred_check_branch
      %19 = sbr.rel (0) target = $region9
    $region8: #{tpu_custom_call.1} parent=1 // pred_region
      %20 = dma.done [#allocation3], 32
    $region9: #{tpu_custom_call.1} parent=1 // pred_fallthru
      _
    %v21 = vlaneseq
    %v22 = vshrl.u32 %v21, 7
    %v23 = vadd.s32 %v22, 8
    %v24 = vadd.s32 %v22, 16
    %v25 = vadd.s32 %v22, 24
    %v26 = vlaneseq
    %v27 = vand.u32 %v26, 127
    %v28 = vmul.u32 %v27, 4
    %vm29 = vcmp.ge.s32.totalorder %v22, %v28
    %vm30 = vcmp.ge.s32.totalorder %v23, %v28
    %vm31 = vcmp.ge.s32.totalorder %v24, %v28
    %vm32 = vcmp.ge.s32.totalorder %v25, %v28
    %v33 = vadd.s32 %v27, 1
    %v34 = vmul.u32 %v33, 4
    %vm35 = vcmp.lt.s32.totalorder %v22, %v34
    %vm36 = vcmp.lt.s32.totalorder %v23, %v34
    %vm37 = vcmp.lt.s32.totalorder %v24, %v34
    %vm38 = vcmp.lt.s32.totalorder %v25, %v34
    %vm39 = vmand %vm29, %vm35
    %vm40 = vmand %vm30, %vm36
    %vm41 = vmand %vm31, %vm37
    %vm42 = vmand %vm32, %vm38
    %v43 = vsel %vm39, 1, 0
    %v44 = vsel %vm40, 1, 0
    %v45 = vsel %vm41, 1, 0
    %v46 = vsel %vm42, 1, 0
    %v47 = vcvt.s32.f32 %v43
    %v48 = vcvt.s32.f32 %v44
    %v49 = vcvt.s32.f32 %v45
    %v50 = vcvt.s32.f32 %v46
    %v51 = vld [vmem:[#allocation2] sm:$0x3]
    %vm52 = vcmask 261120
    %v54 = vsel %vm52, %v51, 0
    %56 = vmatprep.subr.mxu0 0.0
    %57 = vmatpush1.msra.mxu0 %v47
    %58 = vmatprep.subr.mxu0 0.0
    %59 = vmatpush1.msra.mxu0 %v48
    %60 = vmatprep.subr.mxu0 0.0
    %61 = vmatpush1.msra.mxu0 %v49
    %62 = vmatprep.subr.mxu0 0.0
    %63 = vmatpush1.msra.mxu0 %v50
    %64 = vmatprep.subr.mxu0 0.0
    %65 = vmatpush1.msra.mxu0 0.0
    %66 = vmatprep.subr.mxu0 0.0
    %67 = vmatpush1.msra.mxu0 0.0
    %68 = vmatprep.subr.mxu0 0.0
    %69 = vmatpush1.msra.mxu0 0.0
    %70 = vmatprep.subr.mxu0 0.0
    %71 = vmatpush1.msra.mxu0 0.0
    %72 = vmatprep.subr.mxu0 0.0
    %73 = vmatpush1.msra.mxu0 0.0
    %74 = vmatprep.subr.mxu0 0.0
    %75 = vmatpush1.msra.mxu0 0.0
    %76 = vmatprep.subr.mxu0 0.0
    %77 = vmatpush1.msra.mxu0 0.0
    %78 = vmatprep.subr.mxu0 0.0
    %79 = vmatpush1.msra.mxu0 0.0
    %80 = vmatprep.subr.mxu0 0.0
    %81 = vmatpush1.msra.mxu0 0.0
    %82 = vmatprep.subr.mxu0 0.0
    %83 = vmatpush1.msra.mxu0 0.0
    %84 = vmatprep.subr.mxu0 0.0
    %85 = vmatpush1.msra.mxu0 0.0
    %86 = vmatprep.subr.mxu0 0.0
    %87 = vmatpush1.msra.mxu0 0.0
    %88 = vmatprep.subr.mxu0 0.0
    %89 = vmatpush1.msra.mxu0 0.0
    %90 = vmatprep.subr.mxu0 0.0
    %91 = vmatpush1.msra.mxu0 0.0
    %92 = vmatprep.subr.mxu0 0.0
    %93 = vmatpush1.msra.mxu0 0.0
    %94 = vmatprep.subr.mxu0 0.0
    %95 = vmatpush1.msra.mxu0 0.0
    %96 = vmatprep.subr.mxu0 0.0
    %97 = vmatpush1.msra.mxu0 0.0
    %98 = vmatprep.subr.mxu0 0.0
    %99 = vmatpush1.msra.mxu0 0.0
    %100 = vmatprep.subr.mxu0 0.0
    %101 = vmatpush1.msra.mxu0 0.0
    %102 = vmatprep.subr.mxu0 0.0
    %103 = vmatpush1.msra.mxu0 0.0
    %104 = vmatprep.subr.mxu0 0.0
    %105 = vmatpush1.msra.mxu0 0.0
    %106 = vmatprep.subr.mxu0 0.0
    %107 = vmatpush1.msra.mxu0 0.0
    %108 = vmatprep.subr.mxu0 0.0
    %109 = vmatpush1.msra.mxu0 0.0
    %110 = vmatprep.subr.mxu0 0.0
    %111 = vmatpush1.msra.mxu0 0.0
    %112 = vmatprep.subr.mxu0 0.0
    %113 = vmatpush1.msra.mxu0 0.0
    %114 = vmatprep.subr.mxu0 0.0
    %115 = vmatpush1.msra.mxu0 0.0
    %116 = vmatprep.subr.mxu0 0.0
    %117 = vmatpush1.msra.mxu0 0.0
    %118 = vmatprep.subr.mxu0 0.0
    %119 = vmatpush1.msra.mxu0 0.0
    %120 = vmatprep.mubr.f32.mxu0 0.0
    %121 = vmatmul.mubr.f32.gmra.mrb[0].mxu0 %v54
    %v122 = vpop.f32.mrb[0].mxu0
    %v123 = vadd.f32 0.0, %v122
    %v124 = vpop.f32.mrb[0].mxu0
    %125 = vdwg.mxu0
    %v126 = vmul.f32 %v123, 0.25
    %vm127 = vcmask 58368
    %128 = vst.msk [vmem:[#allocation5] sm:$0x3] %vm127, %v126
    // Predicated region
    $region10: #{tpu_custom_call.1} parent=1 // pred_check
      _
    $region11: #{tpu_custom_call.1} parent=1 // pred_check_branch
      %130 = sbr.rel (0) target = $region13
    $region12: #{tpu_custom_call.1} parent=1 // pred_region
      %s132 = ssub.s32 32, 32
      %133 = vsyncadd [#allocation4], %s132
      %s135 = sshll.u32 [#allocation5], 4
      %s136 = int_to_ptr.vmem [resolvable:$true] %s135
      %138 = dma.vmem_to_hbm [thread:$0]  %s136, 32, %s1, [#allocation4]
    $region13: #{tpu_custom_call.1} parent=1 // pred_fallthru
      _
    // Predicated region
    $region14: #{tpu_custom_call.1} parent=1 // pred_check
      _
    $region15: #{tpu_custom_call.1} parent=1 // pred_check_branch
      %140 = sbr.rel (0) target = $region17
    $region16: #{tpu_custom_call.1} parent=1 // pred_region
      %141 = dma.done [#allocation4], 32
    $region17: #{tpu_custom_call.1} parent=1 // pred_fallthru
      _
    %142 = vsyncpa [#allocation3], 1
    %143 = vsyncpa [#allocation4], 1

</llo_original>
